<compile_context>
chip_gen: v7x
topology: tpu7x:2x2x1
jax: 0.10.0
libtpu: 0.0.40
codegen_flags: <defaults>
</compile_context>

<pallas_src>
import math

import numpy as np

import jax
import jax.numpy as jnp
from jax.experimental import pallas as pl
from jax.experimental.pallas import tpu as pltpu

MAX_ATOMIC_NUM = 100
TYPE_PAD = 128              # packed lane-dense output: [0:100]=types, [100:103]=coords
COORD_OFF = MAX_ATOMIC_NUM

HIDDEN_DIM = 32
LATENT_DIM = 32
ZCOND_DIM = LATENT_DIM + HIDDEN_DIM
CUTOFF = 6.0                # `radius` in the module
MAX_NEIGHBORS = 20          # documentation only; see TODO(synk) in the kernel
N_RBF = 16
RBF_GAMMA = 10.0 / (CUTOFF ** 2)
RBF_DELTA = CUTOFF / (N_RBF - 1)

TILE = 128                  # atom-row / atom-col tile (safe on v5e/v6e/v7x)


# ----------------------------------------------------------------------------
# Kernel 1: per-atom embedding MLP (hoisted out of the pairwise grid)
# ----------------------------------------------------------------------------
def _embed_kernel(ae_ref, zc_ref, w_atom_ref, w_z_ref, b_ref, h_ref):
    pre = (jnp.dot(ae_ref[...], w_atom_ref[...],
                   preferred_element_type=jnp.float32)
           + jnp.dot(zc_ref[...], w_z_ref[...],
                     preferred_element_type=jnp.float32)
           + b_ref[...])
    h_ref[...] = pre * jax.nn.sigmoid(pre)          # SiLU


# ----------------------------------------------------------------------------
# Kernel 2: masked pairwise message passing + output heads (lane-dense)
# ----------------------------------------------------------------------------
def _pair_kernel(jmap_ref, valid_ref,
                 h_i_ref, frac_i_ref, lat_i_ref, bid_i_ref,
                 hT_j_ref, hTw_j_ref, fracT_j_ref, bid_j_ref,
                 w_rbf_ref, b_rbf_ref, w_upd_ref, b_upd_ref,
                 w_type_ref, b_type_ref,
                 out_ref,
                 agg_scr, coord_scr):
    i = pl.program_id(0)
    jj = pl.program_id(1)
    njj = pl.num_programs(1)
    p = i * njj + jj

    @pl.when(jj == 0)
    def _init():
        agg_scr[...] = jnp.zeros_like(agg_scr)
        coord_scr[...] = jnp.zeros_like(coord_scr)

    @pl.when(valid_ref[p] != 0)
    def _pairs():
        jt = jmap_ref[p]                            # actual column tile index
        TM = frac_i_ref.shape[0]
        TN = fracT_j_ref.shape[1]

        lat = lat_i_ref[...]                        # (TM, 9)
        fi = frac_i_ref[...]                        # (TM, 3)
        fj = fracT_j_ref[...]                       # (3, TN)  lane-dense

        # minimum-image fractional displacement (j - i), all (TM, TN)
        def mic(c):
            d = fj[c:c + 1, :] - fi[:, c:c + 1]
            return d - jnp.floor(d + 0.5)

        dfx, dfy, dfz = mic(0), mic(1), mic(2)
        # cartesian displacement with the lattice of atom i's crystal
        dcx = dfx * lat[:, 0:1] + dfy * lat[:, 3:4] + dfz * lat[:, 6:7]
        dcy = dfx * lat[:, 1:2] + dfy * lat[:, 4:5] + dfz * lat[:, 7:8]
        dcz = dfx * lat[:, 2:3] + dfy * lat[:, 5:6] + dfz * lat[:, 8:9]
        d2 = dcx * dcx + dcy * dcy + dcz * dcz + 1e-12
        inv = jax.lax.rsqrt(d2)
        dist = d2 * inv

        # edge mask: same crystal (int32 compare), not self, within cutoff
        gi = i * TM + jax.lax.broadcasted_iota(jnp.int32, (TM, TN), 0)
        gj = jt * TN + jax.lax.broadcasted_iota(jnp.int32, (TM, TN), 1)
        mask = ((bid_i_ref[...] == bid_j_ref[...])
                & (gi != gj)
                & (dist < CUTOFF)).astype(jnp.float32)
        # TODO(synk): GemNet-T's OTF graph additionally truncates to
        # max_neighbors (data-dependent top-k by distance) and enumerates
        # periodic images beyond the nearest one -- not reproduced here.

        # factored Gaussian RBF -> SiLU edge MLP, built directly in the
        # lane-dense (TM, H, TN) layout:
        #   exp(-g (d - c_k)^2) = exp(-g d^2) * exp(-g c_k^2) * P^k ,
        #   P = exp(2 g delta d);  exp(-g c_k^2) is folded into w_rbf_ref.
        # Only 2 EUP exps per edge; the k-sum is a VPU recurrence (no
        # reshape/relayout, no matmul on a K=16-starved MXU).
        dc = jnp.minimum(dist, CUTOFF)              # masked anyway; avoids P^15 overflow
        base = jnp.exp(-RBF_GAMMA * dc * dc)        # (TM, TN)
        ratio = jnp.exp((2.0 * RBF_GAMMA * RBF_DELTA) * dc)
        wk = w_rbf_ref[...]                         # (N_RBF, H) pre-scaled f32
        q = base                                    # q_k = base * ratio^k
        e_pre = q[:, None, :] * wk[0, :][None, :, None]
        for k in range(1, N_RBF):
            q = q * ratio
            e_pre = e_pre + q[:, None, :] * wk[k, :][None, :, None]
        e_pre = e_pre + b_rbf_ref[0, :][None, :, None]
        e = e_pre * jax.nn.sigmoid(e_pre)           # (TM, H, TN) SiLU

        # TODO(synk): GemNet-T triplet (spherical-basis) interaction blocks are
        # replaced by a single pairwise gated message-passing step.
        em = e * mask[:, None, :]                   # shared by both heads

        # node aggregation: lane (n) reduction -> (TM, H)
        agg_scr[...] += jnp.sum(em * hT_j_ref[...][None, :, :], axis=2)

        # coordinate noise: force-scaled h_j already folded into hTw (wrapper);
        # sublane (h) reduction -> per-edge scalar (TM, TN)
        f = jnp.sum(em * hTw_j_ref[...][None, :, :], axis=1) * inv
        cx = jnp.sum(f * dcx, axis=1, keepdims=True)
        cy = jnp.sum(f * dcy, axis=1, keepdims=True)
        cz = jnp.sum(f * dcz, axis=1, keepdims=True)
        coord_scr[...] += jnp.concatenate([cx, cy, cz], axis=1)

    @pl.when(jj == njj - 1)
    def _finalize():
        upd = (jnp.dot(agg_scr[...].astype(jnp.bfloat16), w_upd_ref[...],
                       preferred_element_type=jnp.float32) + b_upd_ref[...])
        h_new = h_i_ref[...] + upd * jax.nn.sigmoid(upd)
        logits = (jnp.dot(h_new.astype(jnp.bfloat16), w_type_ref[...],
                          preferred_element_type=jnp.float32) + b_type_ref[...])
        out_ref[...] = logits                                  # lane-dense 128-wide
        out_ref[:, COORD_OFF:COORD_OFF + 3] = coord_scr[...]   # pack coords in spare lanes


# ----------------------------------------------------------------------------
# wrapper: padding, pair-list compaction, pallas_calls
# ----------------------------------------------------------------------------
def _pair_lists(bid_np, nt):
    """Per-row-tile list of column tiles whose crystal-id ranges overlap."""
    tiles = bid_np.reshape(nt, TILE)
    tmin = tiles.min(axis=1)
    tmax = tiles.max(axis=1)
    active = []
    for i in range(nt):
        js = [j for j in range(nt)
              if (tmin[i] <= tmax[j]) and (tmin[j] <= tmax[i])]
        active.append(js)                           # diagonal always present
    maxp = max(len(js) for js in active)
    jmap = np.zeros((nt, maxp), np.int32)
    valid = np.zeros((nt, maxp), np.int32)
    for i, js in enumerate(active):
        jmap[i, :len(js)] = js
        jmap[i, len(js):] = js[-1]                  # repeat -> no new DMA for padding
        valid[i, :len(js)] = 1
    return jmap.reshape(-1), valid.reshape(-1), maxp


def _gemnet_pallas(params, atom_emb, zcond_atom, frac, lat9, batch, n_cryst):
    n = atom_emb.shape[0]
    n_pad = max(TILE, ((n + TILE - 1) // TILE) * TILE)
    pad = n_pad - n
    nt = n_pad // TILE

    def pad_rows(x):
        return jnp.pad(x, ((0, pad), (0, 0)))

    ae_p = pad_rows(atom_emb)
    zc_p = pad_rows(zcond_atom)
    frac_p = pad_rows(frac.astype(jnp.float32))
    lat_p = pad_rows(lat9.astype(jnp.float32))

    # ---- hoisted per-atom embedding MLP (tiny 1-D pallas_call) -------------
    h = pl.pallas_call(
        _embed_kernel,
        out_shape=jax.ShapeDtypeStruct((n_pad, HIDDEN_DIM), jnp.float32),
        grid_spec=pltpu.PrefetchScalarGridSpec(
            num_scalar_prefetch=0,
            grid=(nt,),
            in_specs=[
                pl.BlockSpec((TILE, HIDDEN_DIM), lambda i: (i, 0)),
                pl.BlockSpec((TILE, ZCOND_DIM), lambda i: (i, 0)),
                pl.BlockSpec((HIDDEN_DIM, HIDDEN_DIM), lambda i: (0, 0)),
                pl.BlockSpec((ZCOND_DIM, HIDDEN_DIM), lambda i: (0, 0)),
                pl.BlockSpec((1, HIDDEN_DIM), lambda i: (0, 0)),
            ],
            out_specs=pl.BlockSpec((TILE, HIDDEN_DIM), lambda i: (i, 0))),
        compiler_params=pltpu.CompilerParams(
            dimension_semantics=("parallel",)),
    )(ae_p, zc_p, params["w_atom"], params["w_z"], params["b_embed"])

    # lane-dense (feature-major) column-side views -- layout plumbing only
    hT = h.T                                                    # (H, N_pad)
    hTw = hT * params["w_force"].reshape(HIDDEN_DIM, 1)         # force head folded in
    fracT = frac_p.T                                            # (3, N_pad)

    # padded atoms get unique sentinel crystal ids -> masked out everywhere
    # TODO(synk): the compacted tile-pair list requires `batch` to be
    # host-known (trace-time concrete); under jit fall back to a dense grid.
    batch_np = np.asarray(jax.device_get(batch)).astype(np.int32)
    bid_np = np.concatenate(
        [batch_np, n_cryst + np.arange(pad, dtype=np.int32)])
    jmap_np, valid_np, maxp = _pair_lists(bid_np, nt)

    bid = jnp.asarray(bid_np, dtype=jnp.int32)
    bid_row = bid[:, None]
    bid_col = bid[None, :]

    # fold exp(-g c_k^2) of the RBF factorization into the RBF weights
    centers = jnp.linspace(0.0, CUTOFF, N_RBF, dtype=jnp.float32)
    w_rbfp = (params["w_rbf"].astype(jnp.float32)
              * jnp.exp(-RBF_GAMMA * centers ** 2)[:, None])

    def row(width):
        return pl.BlockSpec((TILE, width), lambda i, jj, jm, vl: (i, 0))

    def col(rows):
        return pl.BlockSpec((rows, TILE),
                            lambda i, jj, jm, vl: (0, jm[i * maxp + jj]))

    def full(shape):
        return pl.BlockSpec(shape, lambda i, jj, jm, vl: (0, 0))

    out_pack = pl.pallas_call(
        _pair_kernel,
        out_shape=jax.ShapeDtypeStruct((n_pad, TYPE_PAD), jnp.float32),
        grid_spec=pltpu.PrefetchScalarGridSpec(
            num_scalar_prefetch=2,
            grid=(nt, maxp),
            in_specs=[
                row(HIDDEN_DIM),                    # h_i      (f32)
                row(3),                             # frac_i   (f32)
                row(9),                             # lat_i    (f32)
                row(1),                             # bid_i    (i32)
                col(HIDDEN_DIM),                    # hT_j     (f32, lane-dense)
                col(HIDDEN_DIM),                    # hTw_j    (f32, lane-dense)
                col(3),                             # fracT_j  (f32, lane-dense)
                col(1),                             # bid_j    (i32)
                full((N_RBF, HIDDEN_DIM)),          # w_rbf'   (f32, pre-scaled)
                full((1, HIDDEN_DIM)),              # b_rbf
                full((HIDDEN_DIM, HIDDEN_DIM)),     # w_upd    (bf16)
                full((1, HIDDEN_DIM)),              # b_upd
                full((HIDDEN_DIM, TYPE_PAD)),       # w_type   (bf16)
                full((1, TYPE_PAD)),                # b_type
            ],
            out_specs=pl.BlockSpec((TILE, TYPE_PAD),
                                   lambda i, jj, jm, vl: (i, 0)),
            scratch_shapes=[
                pltpu.VMEM((TILE, HIDDEN_DIM), jnp.float32),    # agg
                pltpu.VMEM((TILE, 3), jnp.float32),             # coord acc
            ],
        ),
        compiler_params=pltpu.CompilerParams(
            dimension_semantics=("parallel", "arbitrary"),
            vmem_limit_bytes=48 * 1024 * 1024),
    )(jnp.asarray(jmap_np), jnp.asarray(valid_np),
      h, frac_p, lat_p, bid_row,
      hT, hTw, fracT, bid_col,
      w_rbfp, params["b_rbf"], params["w_upd"], params["b_upd"],
      params["w_type"], params["b_type"])

    return (out_pack[:n, :MAX_ATOMIC_NUM],
            out_pack[:n, COORD_OFF:COORD_OFF + 3])


# ----------------------------------------------------------------------------
# plain-JAX glue (shapes / trig / gathers only)
# ----------------------------------------------------------------------------
def lattice_params_to_matrix(lengths, angles):
    """CDVAE's lattice_params_to_matrix_torch (angles in degrees)."""
    angles_r = jnp.deg2rad(angles)
    coses, sins = jnp.cos(angles_r), jnp.sin(angles_r)
    a, b, c = lengths[:, 0], lengths[:, 1], lengths[:, 2]
    cos_a, cos_b, cos_g = coses[:, 0], coses[:, 1], coses[:, 2]
    sin_a, sin_b = sins[:, 0], sins[:, 1]
    val = jnp.clip((cos_a * cos_b - cos_g) / (sin_a * sin_b), -1.0, 1.0)
    gamma_star = jnp.arccos(val)
    zero = jnp.zeros_like(a)
    v_a = jnp.stack([a * sin_b, zero, a * cos_b], axis=1)
    v_b = jnp.stack([-b * sin_a * jnp.cos(gamma_star),
                     b * sin_a * jnp.sin(gamma_star),
                     b * cos_a], axis=1)
    v_c = jnp.stack([zero, zero, c], axis=1)
    return jnp.stack([v_a, v_b, v_c], axis=1)          # (N_cryst, 3, 3)


def time_embedding(timesteps, dim):
    half = dim // 2
    scale = math.log(10000.0) / (half - 1)
    freqs = jnp.exp(jnp.arange(half, dtype=jnp.float32) * -scale)
    args = timesteps.astype(jnp.float32)[:, None] * freqs[None, :]
    return jnp.concatenate([jnp.sin(args), jnp.cos(args)], axis=-1)


def init_params(key):
    ks = jax.random.split(key, 8)

    def w(k, shape, scale=None, dtype=jnp.bfloat16):
        scale = (1.0 / math.sqrt(shape[0])) if scale is None else scale
        return (jax.random.normal(k, shape, jnp.float32) * scale).astype(dtype)

    w_type = w(ks[5], (HIDDEN_DIM, MAX_ATOMIC_NUM))
    w_type = jnp.pad(w_type, ((0, 0), (0, TYPE_PAD - MAX_ATOMIC_NUM)))
    return dict(
        emb_table=w(ks[0], (MAX_ATOMIC_NUM, HIDDEN_DIM), 0.1),
        w_atom=w(ks[1], (HIDDEN_DIM, HIDDEN_DIM)),
        w_z=w(ks[2], (ZCOND_DIM, HIDDEN_DIM)),
        b_embed=jnp.zeros((1, HIDDEN_DIM), jnp.float32),
        w_rbf=w(ks[3], (N_RBF, HIDDEN_DIM), None, jnp.float32),
        b_rbf=jnp.zeros((1, HIDDEN_DIM), jnp.float32),
        w_upd=w(ks[4], (HIDDEN_DIM, HIDDEN_DIM)),
        b_upd=jnp.zeros((1, HIDDEN_DIM), jnp.float32),
        w_type=w_type,
        b_type=jnp.zeros((1, TYPE_PAD), jnp.float32),
        w_force=w(ks[6], (1, HIDDEN_DIM),
                  1.0 / math.sqrt(HIDDEN_DIM), jnp.float32),
    )


def gemnet_t_denoiser_decoder(params, z, pred_frac_coords, pred_atom_types,
                              num_atoms, lengths, angles, batch, timesteps):
    """Mirrors GemNetTDenoiserDecoder.forward.

    returns:
        pred_z_a_noise: (N_atoms, MAX_ATOMIC_NUM)
        pred_z_x_noise: (N_atoms, 3)
    """
    del num_atoms  # `batch` already encodes the atom->crystal assignment
    n_cryst = z.shape[0]
    t_emb = time_embedding(timesteps, HIDDEN_DIM)                  # (Nc, H)
    zcond = jnp.concatenate([z, t_emb], axis=-1)                   # (Nc, L+H)
    zcond_atom = zcond[batch].astype(jnp.bfloat16)                 # (N, L+H)

    lattice = lattice_params_to_matrix(lengths, angles)            # (Nc, 3, 3)
    lat9 = lattice.reshape(-1, 9)[batch].astype(jnp.float32)       # (N, 9)

    # embedding lookup as a gather (no (N,100)x(100,32) one-hot matmul)
    atom_emb = jnp.take(params["emb_table"], pred_atom_types - 1, axis=0)

    return _gemnet_pallas(params, atom_emb, zcond_atom,
                          pred_frac_coords.astype(jnp.float32), lat9,
                          batch, n_cryst)
    # TODO(synk): scale_file-based per-block scaling factors of GemNet-T are
    # not modeled (synthetic weights only).


# ----------------------------------------------------------------------------
if __name__ == "__main__":
    key = jax.random.PRNGKey(0)
    k_z, k_f, k_t, k_len, k_ts = jax.random.split(key, 5)

    n_cryst = 2
    num_atoms = jnp.array([3, 5], dtype=jnp.int32)
    n_atoms = 8
    batch = jnp.array([0, 0, 0, 1, 1, 1, 1, 1], dtype=jnp.int32)

    z = jax.random.normal(k_z, (n_cryst, LATENT_DIM), jnp.float32)
    pred_frac_coords = jax.random.uniform(k_f, (n_atoms, 3), jnp.float32)
    pred_atom_types = jax.random.randint(k_t, (n_atoms,), 1,
                                         MAX_ATOMIC_NUM + 1, jnp.int32)
    lengths = 4.0 + 2.0 * jax.random.uniform(k_len, (n_cryst, 3), jnp.float32)
    angles = jnp.full((n_cryst, 3), 90.0, jnp.float32)
    timesteps = jax.random.randint(k_ts, (n_cryst,), 0, 1000, jnp.int32)

    params = init_params(jax.random.PRNGKey(42))

    pred_z_a_noise, pred_z_x_noise = gemnet_t_denoiser_decoder(
        params, z, pred_frac_coords, pred_atom_types, num_atoms, lengths,
        angles, batch, timesteps)
    jax.block_until_ready((pred_z_a_noise, pred_z_x_noise))

    assert pred_z_a_noise.shape == (n_atoms, MAX_ATOMIC_NUM)
    assert pred_z_a_noise.dtype == jnp.float32
    assert pred_z_x_noise.shape == (n_atoms, 3)
    assert pred_z_x_noise.dtype == jnp.float32
    assert bool(jnp.all(jnp.isfinite(pred_z_a_noise)))
    assert bool(jnp.all(jnp.isfinite(pred_z_x_noise)))
    print("KERNEL_OK")
</pallas_src>

<mosaic_0001>
module attributes {stable_mosaic.version = 11 : i64} {
  func.func @_embed_kernel(%arg0: i32, %arg1: memref<128x32xbf16, #tpu.memory_space<vmem>>, %arg2: memref<128x64xbf16, #tpu.memory_space<vmem>>, %arg3: memref<32x32xbf16, #tpu.memory_space<vmem>>, %arg4: memref<64x32xbf16, #tpu.memory_space<vmem>>, %arg5: memref<1x32xf32, #tpu.memory_space<vmem>>, %arg6: memref<128x32xf32, #tpu.memory_space<vmem>>) attributes {dimension_semantics = [#tpu.dimension_semantics<parallel>], iteration_bounds = array<i64: 1>, scalar_prefetch = 0 : i64, scratch_operands = 0 : i64, tpu.core_type = #tpu.core_type<tc>, window_params = [{transform_indices = @transform_0, window_bounds = array<i64: 128, 32>}, {transform_indices = @transform_1, window_bounds = array<i64: 128, 64>}, {pipeline_mode = #tpu.pipeline_mode<synchronous>, transform_indices = @transform_2, window_bounds = array<i64: 32, 32>}, {pipeline_mode = #tpu.pipeline_mode<synchronous>, transform_indices = @transform_3, window_bounds = array<i64: 64, 32>}, {pipeline_mode = #tpu.pipeline_mode<synchronous>, transform_indices = @transform_4, window_bounds = array<i64: 1, 32>}, {transform_indices = @transform_5, window_bounds = array<i64: 128, 32>}]} {
    %c0 = arith.constant 0 : index
    %c0_0 = arith.constant 0 : index
    %0 = vector.load %arg1[%c0, %c0_0] : memref<128x32xbf16, #tpu.memory_space<vmem>>, vector<128x32xbf16>
    %c0_1 = arith.constant 0 : index
    %c0_2 = arith.constant 0 : index
    %1 = vector.load %arg3[%c0_1, %c0_2] : memref<32x32xbf16, #tpu.memory_space<vmem>>, vector<32x32xbf16>
    %cst = arith.constant dense<0.000000e+00> : vector<128x32xf32>
    %2 = tpu.matmul %0, %1, %cst {dimension_numbers = #tpu.dot_dimension_numbers<[1], [0], [0], [1], [0, 0, 1, 1], [], []>} : vector<128x32xbf16>, vector<32x32xbf16>, vector<128x32xf32> -> vector<128x32xf32>
    %c0_3 = arith.constant 0 : index
    %c0_4 = arith.constant 0 : index
    %3 = vector.load %arg2[%c0_3, %c0_4] : memref<128x64xbf16, #tpu.memory_space<vmem>>, vector<128x64xbf16>
    %c0_5 = arith.constant 0 : index
    %c0_6 = arith.constant 0 : index
    %4 = vector.load %arg4[%c0_5, %c0_6] : memref<64x32xbf16, #tpu.memory_space<vmem>>, vector<64x32xbf16>
    %cst_7 = arith.constant dense<0.000000e+00> : vector<128x32xf32>
    %5 = tpu.matmul %3, %4, %cst_7 {dimension_numbers = #tpu.dot_dimension_numbers<[1], [0], [0], [1], [0, 0, 1, 1], [], []>} : vector<128x64xbf16>, vector<64x32xbf16>, vector<128x32xf32> -> vector<128x32xf32>
    %6 = arith.addf %2, %5 : vector<128x32xf32>
    %c0_8 = arith.constant 0 : index
    %c0_9 = arith.constant 0 : index
    %7 = vector.load %arg5[%c0_8, %c0_9] : memref<1x32xf32, #tpu.memory_space<vmem>>, vector<1x32xf32>
    %8 = vector.broadcast %7 : vector<1x32xf32> to vector<128x32xf32>
    %9 = arith.addf %6, %8 : vector<128x32xf32>
    %10 = arith.negf %9 : vector<128x32xf32>
    %11 = math.exp %10 : vector<128x32xf32>
    %cst_10 = arith.constant 1.000000e+00 : f32
    %12 = vector.broadcast %cst_10 : f32 to vector<128x32xf32>
    %13 = arith.addf %12, %11 : vector<128x32xf32>
    %14 = arith.divf %12, %13 : vector<128x32xf32>
    %15 = arith.mulf %9, %14 : vector<128x32xf32>
    %c0_11 = arith.constant 0 : index
    %c0_12 = arith.constant 0 : index
    %16 = vector.load %arg6[%c0_11, %c0_12] : memref<128x32xf32, #tpu.memory_space<vmem>>, vector<128x32xf32>
    tpu.vector_store %arg6[%c0_11, %c0_12], %15 {strides = array<i32>} : memref<128x32xf32, #tpu.memory_space<vmem>>, vector<128x32xf32>,
    return
  }
  func.func @transform_0(%arg0: i32) -> (i32, i32) {
    %c0_i32 = arith.constant 0 : i32
    %c0_i32_0 = arith.constant 0 : i32
    return %arg0, %c0_i32 : i32, i32
  }
  func.func @transform_1(%arg0: i32) -> (i32, i32) {
    %c0_i32 = arith.constant 0 : i32
    %c0_i32_0 = arith.constant 0 : i32
    return %arg0, %c0_i32 : i32, i32
  }
  func.func @transform_2(%arg0: i32) -> (i32, i32) {
    %c0_i32 = arith.constant 0 : i32
    %c0_i32_0 = arith.constant 0 : i32
    %c0_i32_1 = arith.constant 0 : i32
    return %c0_i32, %c0_i32_0 : i32, i32
  }
  func.func @transform_3(%arg0: i32) -> (i32, i32) {
    %c0_i32 = arith.constant 0 : i32
    %c0_i32_0 = arith.constant 0 : i32
    %c0_i32_1 = arith.constant 0 : i32
    return %c0_i32, %c0_i32_0 : i32, i32
  }
  func.func @transform_4(%arg0: i32) -> (i32, i32) {
    %c0_i32 = arith.constant 0 : i32
    %c0_i32_0 = arith.constant 0 : i32
    %c0_i32_1 = arith.constant 0 : i32
    return %c0_i32, %c0_i32_0 : i32, i32
  }
  func.func @transform_5(%arg0: i32) -> (i32, i32) {
    %c0_i32 = arith.constant 0 : i32
    %c0_i32_0 = arith.constant 0 : i32
    return %arg0, %c0_i32 : i32, i32
  }
}

</mosaic_0001>

<llo_original>
// kernel: tpu_custom_call.1
$region0: #{tpu_custom_call.1}
  #allocation0 [shape = 'u32[]', space=smem, size = 0x4, offset = 0x4, fixed_abs, tag = 'smem constant byte address 0x4 - core index']
  #allocation1 [shape = 'u32[144,128]{1,0:T(1,128)}', space=vmem, size = 0x12000, scoped, tag = 'internal scratch']
  %s0 = inlined_call_operand.vmem [shape: bf16[128,32], index: 0, kind: input, shape index: {}]
  %s1 = inlined_call_operand.vmem [shape: bf16[128,64], index: 1, kind: input, shape index: {}]
  %s2 = inlined_call_operand.vmem [shape: bf16[32,32], index: 2, kind: input, shape index: {}]
  %s3 = inlined_call_operand.vmem [shape: bf16[64,32], index: 3, kind: input, shape index: {}]
  %s4 = inlined_call_operand.vmem [shape: f32[1,32], index: 4, kind: input, shape index: {}]
  %s5 = inlined_call_operand.vmem [shape: f32[128,32], index: 5, kind: output, shape index: {}]
  %s6 = sld [smem:[#allocation0]]
  $region30: #{tpu_custom_call.1} parent=0
    _
  %s8 = ssub.s32 1, %s6
  %s9 = scalar_select 0, %s8, %s6
  // Predicated region
  $region2: #{tpu_custom_call.1} parent=0 // pred_check
    _
  $region3: #{tpu_custom_call.1} parent=0 // pred_check_branch
    %11 = sbr.rel (0) target = $region5
  $region4: #{tpu_custom_call.1} parent=0 // pred_region
    _
  $region5: #{tpu_custom_call.1} parent=0 // pred_fallthru
    _
  // Predicated region
  $region6: #{tpu_custom_call.1} parent=0 // pred_check
    _
  $region7: #{tpu_custom_call.1} parent=0 // pred_check_branch
    %13 = sbr.rel (0) target = $region9
  $region8: #{tpu_custom_call.1} parent=0 // pred_region
    _
  $region9: #{tpu_custom_call.1} parent=0 // pred_fallthru
    _
  // Predicated region
  $region10: #{tpu_custom_call.1} parent=0 // pred_check
    _
  $region11: #{tpu_custom_call.1} parent=0 // pred_check_branch
    %15 = sbr.rel (0) target = $region13
  $region12: #{tpu_custom_call.1} parent=0 // pred_region
    _
  $region13: #{tpu_custom_call.1} parent=0 // pred_fallthru
    _
  // Predicated region
  $region14: #{tpu_custom_call.1} parent=0 // pred_check
    _
  $region15: #{tpu_custom_call.1} parent=0 // pred_check_branch
    %17 = sbr.rel (0) target = $region17
  $region16: #{tpu_custom_call.1} parent=0 // pred_region
    _
  $region17: #{tpu_custom_call.1} parent=0 // pred_fallthru
    _
  // Predicated region
  $region18: #{tpu_custom_call.1} parent=0 // pred_check
    _
  $region19: #{tpu_custom_call.1} parent=0 // pred_check_branch
    %19 = sbr.rel (0) target = $region21
  $region20: #{tpu_custom_call.1} parent=0 // pred_region
    _
  $region21: #{tpu_custom_call.1} parent=0 // pred_fallthru
    _
  %v21 = vld [vmem:[%s0] sm:$0xf]
  %v22 = vld [vmem:[%s0 + $0x4] sm:$0xf]
  %v23 = vld [vmem:[%s0 + $0x8] sm:$0xf]
  %v24 = vld [vmem:[%s0 + $0xc] sm:$0xf]
  %v25 = vld [vmem:[%s0 + $0x10] sm:$0xf]
  %v26 = vld [vmem:[%s0 + $0x14] sm:$0xf]
  %v27 = vld [vmem:[%s0 + $0x18] sm:$0xf]
  %v28 = vld [vmem:[%s0 + $0x1c] sm:$0xf]
  %v29 = vld [vmem:[%s0 + $0x20] sm:$0xf]
  %v30 = vld [vmem:[%s0 + $0x24] sm:$0xf]
  %v31 = vld [vmem:[%s0 + $0x28] sm:$0xf]
  %v32 = vld [vmem:[%s0 + $0x2c] sm:$0xf]
  %v33 = vld [vmem:[%s0 + $0x30] sm:$0xf]
  %v34 = vld [vmem:[%s0 + $0x34] sm:$0xf]
  %v35 = vld [vmem:[%s0 + $0x38] sm:$0xf]
  %v36 = vld [vmem:[%s0 + $0x3c] sm:$0xf]
  %v37 = vld [vmem:[%s2] sm:$0xf]
  %v38 = vld [vmem:[%s2 + $0x4] sm:$0xf]
  %v39 = vld [vmem:[%s2 + $0x8] sm:$0xf]
  %v40 = vld [vmem:[%s2 + $0xc] sm:$0xf]
  %v41 = vld [vmem:[%s1] sm:$0xf]
  %v42 = vld [vmem:[%s1 + $0x4] sm:$0xf]
  %v43 = vld [vmem:[%s1 + $0x8] sm:$0xf]
  %v44 = vld [vmem:[%s1 + $0xc] sm:$0xf]
  %v45 = vld [vmem:[%s1 + $0x10] sm:$0xf]
  %v46 = vld [vmem:[%s1 + $0x14] sm:$0xf]
  %v47 = vld [vmem:[%s1 + $0x18] sm:$0xf]
  %v48 = vld [vmem:[%s1 + $0x1c] sm:$0xf]
  %v49 = vld [vmem:[%s1 + $0x20] sm:$0xf]
  %v50 = vld [vmem:[%s1 + $0x24] sm:$0xf]
  %v51 = vld [vmem:[%s1 + $0x28] sm:$0xf]
  %v52 = vld [vmem:[%s1 + $0x2c] sm:$0xf]
  %v53 = vld [vmem:[%s1 + $0x30] sm:$0xf]
  %v54 = vld [vmem:[%s1 + $0x34] sm:$0xf]
  %v55 = vld [vmem:[%s1 + $0x38] sm:$0xf]
  %v56 = vld [vmem:[%s1 + $0x3c] sm:$0xf]
  %v57 = vld [vmem:[%s3] sm:$0xf]
  %v58 = vld [vmem:[%s3 + $0x4] sm:$0xf]
  %v59 = vld [vmem:[%s3 + $0x8] sm:$0xf]
  %v60 = vld [vmem:[%s3 + $0xc] sm:$0xf]
  %v61 = vld [vmem:[%s3 + $0x10] sm:$0xf]
  %v62 = vld [vmem:[%s3 + $0x14] sm:$0xf]
  %v63 = vld [vmem:[%s3 + $0x18] sm:$0xf]
  %v64 = vld [vmem:[%s3 + $0x1c] sm:$0xf]
  %v81 = vunpack.c.l.b16 %v41
  %v82 = vunpack.c.l.b16 %v42
  %v83 = vunpack.c.l.b16 %v43
  %v84 = vunpack.c.l.b16 %v44
  %v85 = vunpack.c.l.b16 %v45
  %v86 = vunpack.c.l.b16 %v46
  %v87 = vunpack.c.l.b16 %v47
  %v88 = vunpack.c.l.b16 %v48
  %v89 = vunpack.c.l.b16 %v49
  %v90 = vunpack.c.l.b16 %v50
  %v91 = vunpack.c.l.b16 %v51
  %v92 = vunpack.c.l.b16 %v52
  %v93 = vunpack.c.l.b16 %v53
  %v94 = vunpack.c.l.b16 %v54
  %v95 = vunpack.c.l.b16 %v55
  %v96 = vunpack.c.l.b16 %v56
  %v97 = vpack.c.b16 %v82, %v81
  %v98 = vpack.c.b16 %v84, %v83
  %v99 = vpack.c.b16 %v86, %v85
  %v100 = vpack.c.b16 %v88, %v87
  %v101 = vpack.c.b16 %v90, %v89
  %v102 = vpack.c.b16 %v92, %v91
  %v103 = vpack.c.b16 %v94, %v93
  %v104 = vpack.c.b16 %v96, %v95
  %v113 = vunpack.c.l.b16 %v57
  %v114 = vunpack.c.l.b16 %v58
  %v115 = vunpack.c.l.b16 %v59
  %v116 = vunpack.c.l.b16 %v60
  %v117 = vunpack.c.l.b16 %v61
  %v118 = vunpack.c.l.b16 %v62
  %v119 = vunpack.c.l.b16 %v63
  %v120 = vunpack.c.l.b16 %v64
  %v121 = vpack.c.b16 %v114, %v113
  %v122 = vpack.c.b16 %v116, %v115
  %v123 = vpack.c.b16 %v118, %v117
  %v124 = vpack.c.b16 %v120, %v119
  %vm129 = vcmask 523264
  %v131 = vsel %vm129, %v97, 0
  %v134 = vsel %vm129, %v98, 0
  %v137 = vsel %vm129, %v99, 0
  %v140 = vsel %vm129, %v100, 0
  %v143 = vsel %vm129, %v101, 0
  %v146 = vsel %vm129, %v102, 0
  %v149 = vsel %vm129, %v103, 0
  %v152 = vsel %vm129, %v104, 0
  %154 = vmatprep.subr.bf16.mxu0 0
  %155 = vmatpush1.bf16.msra.mxu0 %v121
  %156 = vmatprep.subr.bf16.mxu0 0
  %157 = vmatpush1.bf16.msra.mxu0 %v122
  %158 = vmatprep.subr.bf16.mxu0 0
  %159 = vmatpush1.bf16.msra.mxu0 %v123
  %160 = vmatprep.subr.bf16.mxu0 0
  %161 = vmatpush1.bf16.msra.mxu0 %v124
  %162 = vmatprep.subr.bf16.mxu0 0
  %163 = vmatpush1.bf16.msra.mxu0 0
  %164 = vmatprep.subr.bf16.mxu0 0
  %165 = vmatpush1.bf16.msra.mxu0 0
  %166 = vmatprep.subr.bf16.mxu0 0
  %167 = vmatpush1.bf16.msra.mxu0 0
  %168 = vmatprep.subr.bf16.mxu0 0
  %169 = vmatpush1.bf16.msra.mxu0 0
  %170 = vmatprep.subr.bf16.mxu0 0
  %171 = vmatpush1.bf16.msra.mxu0 0
  %172 = vmatprep.subr.bf16.mxu0 0
  %173 = vmatpush1.bf16.msra.mxu0 0
  %174 = vmatprep.subr.bf16.mxu0 0
  %175 = vmatpush1.bf16.msra.mxu0 0
  %176 = vmatprep.subr.bf16.mxu0 0
  %177 = vmatpush1.bf16.msra.mxu0 0
  %178 = vmatprep.subr.bf16.mxu0 0
  %179 = vmatpush1.bf16.msra.mxu0 0
  %180 = vmatprep.subr.bf16.mxu0 0
  %181 = vmatpush1.bf16.msra.mxu0 0
  %182 = vmatprep.subr.bf16.mxu0 0
  %183 = vmatpush1.bf16.msra.mxu0 0
  %184 = vmatprep.subr.bf16.mxu0 0
  %185 = vmatpush1.bf16.msra.mxu0 0
  %186 = vmatprep.mubr.bf16.mxu0 0
  %187 = vmatmul.mubr.bf16.gmra.mrb[0].mxu0 %v131
  %v188 = vpop.f32.mrb[0].mxu0
  %v189 = vadd.f32 0.0, %v188
  %v190 = vpop.f32.mrb[0].mxu0
  %v191 = vpop.f32.mrb[0].mxu0
  %v192 = vadd.f32 0.0, %v191
  %v193 = vpop.f32.mrb[0].mxu0
  %194 = vmatprep.mubr.bf16.mxu0 0
  %195 = vmatmul.mubr.bf16.gmra.mrb[0].mxu0 %v134
  %v196 = vpop.f32.mrb[0].mxu0
  %v197 = vadd.f32 0.0, %v196
  %v198 = vpop.f32.mrb[0].mxu0
  %v199 = vpop.f32.mrb[0].mxu0
  %v200 = vadd.f32 0.0, %v199
  %v201 = vpop.f32.mrb[0].mxu0
  %202 = vmatprep.mubr.bf16.mxu0 0
  %203 = vmatmul.mubr.bf16.gmra.mrb[0].mxu0 %v137
  %v204 = vpop.f32.mrb[0].mxu0
  %v205 = vadd.f32 0.0, %v204
  %v206 = vpop.f32.mrb[0].mxu0
  %v207 = vpop.f32.mrb[0].mxu0
  %v208 = vadd.f32 0.0, %v207
  %v209 = vpop.f32.mrb[0].mxu0
  %210 = vmatprep.mubr.bf16.mxu0 0
  %211 = vmatmul.mubr.bf16.gmra.mrb[0].mxu0 %v140
  %v212 = vpop.f32.mrb[0].mxu0
  %v213 = vadd.f32 0.0, %v212
  %v214 = vpop.f32.mrb[0].mxu0
  %v215 = vpop.f32.mrb[0].mxu0
  %v216 = vadd.f32 0.0, %v215
  %v217 = vpop.f32.mrb[0].mxu0
  %218 = vmatprep.mubr.bf16.mxu0 0
  %219 = vmatmul.mubr.bf16.gmra.mrb[0].mxu0 %v143
  %v220 = vpop.f32.mrb[0].mxu0
  %v221 = vadd.f32 0.0, %v220
  %v222 = vpop.f32.mrb[0].mxu0
  %v223 = vpop.f32.mrb[0].mxu0
  %v224 = vadd.f32 0.0, %v223
  %v225 = vpop.f32.mrb[0].mxu0
  %226 = vmatprep.mubr.bf16.mxu0 0
  %227 = vmatmul.mubr.bf16.gmra.mrb[0].mxu0 %v146
  %v228 = vpop.f32.mrb[0].mxu0
  %v229 = vadd.f32 0.0, %v228
  %v230 = vpop.f32.mrb[0].mxu0
  %v231 = vpop.f32.mrb[0].mxu0
  %v232 = vadd.f32 0.0, %v231
  %v233 = vpop.f32.mrb[0].mxu0
  %234 = vmatprep.mubr.bf16.mxu0 0
  %235 = vmatmul.mubr.bf16.gmra.mrb[0].mxu0 %v149
  %v236 = vpop.f32.mrb[0].mxu0
  %v237 = vadd.f32 0.0, %v236
  %v238 = vpop.f32.mrb[0].mxu0
  %v239 = vpop.f32.mrb[0].mxu0
  %v240 = vadd.f32 0.0, %v239
  %v241 = vpop.f32.mrb[0].mxu0
  %242 = vmatprep.mubr.bf16.mxu0 0
  %243 = vmatmul.mubr.bf16.gmra.mrb[0].mxu0 %v152
  %v244 = vpop.f32.mrb[0].mxu0
  %v245 = vadd.f32 0.0, %v244
  %v246 = vpop.f32.mrb[0].mxu0
  %v247 = vpop.f32.mrb[0].mxu0
  %v248 = vadd.f32 0.0, %v247
  %v249 = vpop.f32.mrb[0].mxu0
  %250 = vdwg.mxu0
  %v267 = vunpack.c.l.b16 %v21
  %v268 = vunpack.c.l.b16 %v22
  %v269 = vunpack.c.l.b16 %v23
  %v270 = vunpack.c.l.b16 %v24
  %v271 = vunpack.c.l.b16 %v25
  %v272 = vunpack.c.l.b16 %v26
  %v273 = vunpack.c.l.b16 %v27
  %v274 = vunpack.c.l.b16 %v28
  %v275 = vunpack.c.l.b16 %v29
  %v276 = vunpack.c.l.b16 %v30
  %v277 = vunpack.c.l.b16 %v31
  %v278 = vunpack.c.l.b16 %v32
  %v279 = vunpack.c.l.b16 %v33
  %v280 = vunpack.c.l.b16 %v34
  %v281 = vunpack.c.l.b16 %v35
  %v282 = vunpack.c.l.b16 %v36
  %v283 = vpack.c.b16 %v268, %v267
  %v284 = vpack.c.b16 %v270, %v269
  %v285 = vpack.c.b16 %v272, %v271
  %v286 = vpack.c.b16 %v274, %v273
  %v287 = vpack.c.b16 %v276, %v275
  %v288 = vpack.c.b16 %v278, %v277
  %v289 = vpack.c.b16 %v280, %v279
  %v290 = vpack.c.b16 %v282, %v281
  %v295 = vunpack.c.l.b16 %v37
  %v296 = vunpack.c.l.b16 %v38
  %v297 = vunpack.c.l.b16 %v39
  %v298 = vunpack.c.l.b16 %v40
  %v299 = vpack.c.b16 %v296, %v295
  %v300 = vpack.c.b16 %v298, %v297
  %vm303 = vcmask 261120
  %v305 = vsel %vm303, %v283, 0
  %v308 = vsel %vm303, %v284, 0
  %v311 = vsel %vm303, %v285, 0
  %v314 = vsel %vm303, %v286, 0
  %v317 = vsel %vm303, %v287, 0
  %v320 = vsel %vm303, %v288, 0
  %v323 = vsel %vm303, %v289, 0
  %v326 = vsel %vm303, %v290, 0
  %328 = vmatprep.subr.bf16.mxu0 0
  %329 = vmatpush1.bf16.msra.mxu0 %v299
  %330 = vmatprep.subr.bf16.mxu0 0
  %331 = vmatpush1.bf16.msra.mxu0 %v300
  %332 = vmatprep.subr.bf16.mxu0 0
  %333 = vmatpush1.bf16.msra.mxu0 0
  %334 = vmatprep.subr.bf16.mxu0 0
  %335 = vmatpush1.bf16.msra.mxu0 0
  %336 = vmatprep.subr.bf16.mxu0 0
  %337 = vmatpush1.bf16.msra.mxu0 0
  %338 = vmatprep.subr.bf16.mxu0 0
  %339 = vmatpush1.bf16.msra.mxu0 0
  %340 = vmatprep.subr.bf16.mxu0 0
  %341 = vmatpush1.bf16.msra.mxu0 0
  %342 = vmatprep.subr.bf16.mxu0 0
  %343 = vmatpush1.bf16.msra.mxu0 0
  %344 = vmatprep.subr.bf16.mxu0 0
  %345 = vmatpush1.bf16.msra.mxu0 0
  %346 = vmatprep.subr.bf16.mxu0 0
  %347 = vmatpush1.bf16.msra.mxu0 0
  %348 = vmatprep.subr.bf16.mxu0 0
  %349 = vmatpush1.bf16.msra.mxu0 0
  %350 = vmatprep.subr.bf16.mxu0 0
  %351 = vmatpush1.bf16.msra.mxu0 0
  %352 = vmatprep.subr.bf16.mxu0 0
  %353 = vmatpush1.bf16.msra.mxu0 0
  %354 = vmatprep.subr.bf16.mxu0 0
  %355 = vmatpush1.bf16.msra.mxu0 0
  %356 = vmatprep.subr.bf16.mxu0 0
  %357 = vmatpush1.bf16.msra.mxu0 0
  %358 = vmatprep.subr.bf16.mxu0 0
  %359 = vmatpush1.bf16.msra.mxu0 0
  %360 = vmatprep.mubr.bf16.mxu0 0
  %361 = vmatmul.mubr.bf16.gmra.mrb[0].mxu0 %v305
  %v362 = vpop.f32.mrb[0].mxu0
  %v363 = vadd.f32 %v189, %v362
  %v364 = vpop.f32.mrb[0].mxu0
  %v365 = vpop.f32.mrb[0].mxu0
  %v366 = vadd.f32 %v192, %v365
  %v367 = vpop.f32.mrb[0].mxu0
  %368 = vmatprep.mubr.bf16.mxu0 0
  %369 = vmatmul.mubr.bf16.gmra.mrb[0].mxu0 %v308
  %v370 = vpop.f32.mrb[0].mxu0
  %v371 = vadd.f32 %v197, %v370
  %v372 = vpop.f32.mrb[0].mxu0
  %v373 = vpop.f32.mrb[0].mxu0
  %v374 = vadd.f32 %v200, %v373
  %v375 = vpop.f32.mrb[0].mxu0
  %376 = vmatprep.mubr.bf16.mxu0 0
  %377 = vmatmul.mubr.bf16.gmra.mrb[0].mxu0 %v311
  %v378 = vpop.f32.mrb[0].mxu0
  %v379 = vadd.f32 %v205, %v378
  %v380 = vpop.f32.mrb[0].mxu0
  %v381 = vpop.f32.mrb[0].mxu0
  %v382 = vadd.f32 %v208, %v381
  %v383 = vpop.f32.mrb[0].mxu0
  %384 = vmatprep.mubr.bf16.mxu0 0
  %385 = vmatmul.mubr.bf16.gmra.mrb[0].mxu0 %v314
  %v386 = vpop.f32.mrb[0].mxu0
  %v387 = vadd.f32 %v213, %v386
  %v388 = vpop.f32.mrb[0].mxu0
  %v389 = vpop.f32.mrb[0].mxu0
  %v390 = vadd.f32 %v216, %v389
  %v391 = vpop.f32.mrb[0].mxu0
  %392 = vmatprep.mubr.bf16.mxu0 0
  %393 = vmatmul.mubr.bf16.gmra.mrb[0].mxu0 %v317
  %v394 = vpop.f32.mrb[0].mxu0
  %v395 = vadd.f32 %v221, %v394
  %v396 = vpop.f32.mrb[0].mxu0
  %v397 = vpop.f32.mrb[0].mxu0
  %v398 = vadd.f32 %v224, %v397
  %v399 = vpop.f32.mrb[0].mxu0
  %400 = vmatprep.mubr.bf16.mxu0 0
  %401 = vmatmul.mubr.bf16.gmra.mrb[0].mxu0 %v320
  %v402 = vpop.f32.mrb[0].mxu0
  %v403 = vadd.f32 %v229, %v402
  %v404 = vpop.f32.mrb[0].mxu0
  %v405 = vpop.f32.mrb[0].mxu0
  %v406 = vadd.f32 %v232, %v405
  %v407 = vpop.f32.mrb[0].mxu0
  %408 = vmatprep.mubr.bf16.mxu0 0
  %409 = vmatmul.mubr.bf16.gmra.mrb[0].mxu0 %v323
  %v410 = vpop.f32.mrb[0].mxu0
  %v411 = vadd.f32 %v237, %v410
  %v412 = vpop.f32.mrb[0].mxu0
  %v413 = vpop.f32.mrb[0].mxu0
  %v414 = vadd.f32 %v240, %v413
  %v415 = vpop.f32.mrb[0].mxu0
  %416 = vmatprep.mubr.bf16.mxu0 0
  %417 = vmatmul.mubr.bf16.gmra.mrb[0].mxu0 %v326
  %v418 = vpop.f32.mrb[0].mxu0
  %v419 = vadd.f32 %v245, %v418
  %v420 = vpop.f32.mrb[0].mxu0
  %v421 = vpop.f32.mrb[0].mxu0
  %v422 = vadd.f32 %v248, %v421
  %v423 = vpop.f32.mrb[0].mxu0
  %424 = vdwg.mxu0
  %v425 = vld [vmem:[%s4] sm:$0x1]
  %v427 = vlaneseq
  %v428 = vshrl.u32 %v427, 7
  %v429 = vsub.s32 0, %v428
  %v430 = vrot.slane %v425, %v429
  %v432 = vadd.f32 %v363, %v430
  %v433 = vadd.f32 %v366, %v430
  %v434 = vadd.f32 %v371, %v430
  %v435 = vadd.f32 %v374, %v430
  %v436 = vadd.f32 %v379, %v430
  %v437 = vadd.f32 %v382, %v430
  %v438 = vadd.f32 %v387, %v430
  %v439 = vadd.f32 %v390, %v430
  %v440 = vadd.f32 %v395, %v430
  %v441 = vadd.f32 %v398, %v430
  %v442 = vadd.f32 %v403, %v430
  %v443 = vadd.f32 %v406, %v430
  %v444 = vadd.f32 %v411, %v430
  %v445 = vadd.f32 %v414, %v430
  %v446 = vadd.f32 %v419, %v430
  %v447 = vadd.f32 %v422, %v430
  %v448 = vxor.u32 %v432, 2147483648
  %v449 = vxor.u32 %v433, 2147483648
  %v450 = vxor.u32 %v434, 2147483648
  %v451 = vxor.u32 %v435, 2147483648
  %v452 = vxor.u32 %v436, 2147483648
  %v453 = vxor.u32 %v437, 2147483648
  %v454 = vxor.u32 %v438, 2147483648
  %v455 = vxor.u32 %v439, 2147483648
  %v456 = vxor.u32 %v440, 2147483648
  %v457 = vxor.u32 %v441, 2147483648
  %v458 = vxor.u32 %v442, 2147483648
  %v459 = vxor.u32 %v443, 2147483648
  %v460 = vxor.u32 %v444, 2147483648
  %v461 = vxor.u32 %v445, 2147483648
  %v462 = vxor.u32 %v446, 2147483648
  %v463 = vxor.u32 %v447, 2147483648
  %v464 = vmul.f32 %v448, 1.442695
  %v465 = vpow.pop %v464
  %v466 = vmul.f32 %v449, 1.442695
  %v467 = vpow.pop %v466
  %v468 = vmul.f32 %v450, 1.442695
  %v469 = vpow.pop %v468
  %v470 = vmul.f32 %v451, 1.442695
  %v471 = vpow.pop %v470
  %v472 = vmul.f32 %v452, 1.442695
  %v473 = vpow.pop %v472
  %v474 = vmul.f32 %v453, 1.442695
  %v475 = vpow.pop %v474
  %v476 = vmul.f32 %v454, 1.442695
  %v477 = vpow.pop %v476
  %v478 = vmul.f32 %v455, 1.442695
  %v479 = vpow.pop %v478
  %v480 = vmul.f32 %v456, 1.442695
  %v481 = vpow.pop %v480
  %v482 = vmul.f32 %v457, 1.442695
  %v483 = vpow.pop %v482
  %v484 = vmul.f32 %v458, 1.442695
  %v485 = vpow.pop %v484
  %v486 = vmul.f32 %v459, 1.442695
  %v487 = vpow.pop %v486
  %v488 = vmul.f32 %v460, 1.442695
  %v489 = vpow.pop %v488
  %v490 = vmul.f32 %v461, 1.442695
  %v491 = vpow.pop %v490
  %v492 = vmul.f32 %v462, 1.442695
  %v493 = vpow.pop %v492
  %v494 = vmul.f32 %v463, 1.442695
  %v495 = vpow.pop %v494
  %v496 = vadd.f32 %v465, 1.0
  %v497 = vadd.f32 %v467, 1.0
  %v498 = vadd.f32 %v469, 1.0
  %v499 = vadd.f32 %v471, 1.0
  %v500 = vadd.f32 %v473, 1.0
  %v501 = vadd.f32 %v475, 1.0
  %v502 = vadd.f32 %v477, 1.0
  %v503 = vadd.f32 %v479, 1.0
  %v504 = vadd.f32 %v481, 1.0
  %v505 = vadd.f32 %v483, 1.0
  %v506 = vadd.f32 %v485, 1.0
  %v507 = vadd.f32 %v487, 1.0
  %v508 = vadd.f32 %v489, 1.0
  %v509 = vadd.f32 %v491, 1.0
  %v510 = vadd.f32 %v493, 1.0
  %v511 = vadd.f32 %v495, 1.0
  %v512 = vrcp.pop %v496
  %v513 = vmul.f32 1.0, %v512
  %v514 = vrcp.pop %v497
  %v515 = vmul.f32 1.0, %v514
  %v516 = vrcp.pop %v498
  %v517 = vmul.f32 1.0, %v516
  %v518 = vrcp.pop %v499
  %v519 = vmul.f32 1.0, %v518
  %v520 = vrcp.pop %v500
  %v521 = vmul.f32 1.0, %v520
  %v522 = vrcp.pop %v501
  %v523 = vmul.f32 1.0, %v522
  %v524 = vrcp.pop %v502
  %v525 = vmul.f32 1.0, %v524
  %v526 = vrcp.pop %v503
  %v527 = vmul.f32 1.0, %v526
  %v528 = vrcp.pop %v504
  %v529 = vmul.f32 1.0, %v528
  %v530 = vrcp.pop %v505
  %v531 = vmul.f32 1.0, %v530
  %v532 = vrcp.pop %v506
  %v533 = vmul.f32 1.0, %v532
  %v534 = vrcp.pop %v507
  %v535 = vmul.f32 1.0, %v534
  %v536 = vrcp.pop %v508
  %v537 = vmul.f32 1.0, %v536
  %v538 = vrcp.pop %v509
  %v539 = vmul.f32 1.0, %v538
  %v540 = vrcp.pop %v510
  %v541 = vmul.f32 1.0, %v540
  %v542 = vrcp.pop %v511
  %v543 = vmul.f32 1.0, %v542
  %v544 = vmul.f32 %v432, %v513
  %v545 = vmul.f32 %v433, %v515
  %v546 = vmul.f32 %v434, %v517
  %v547 = vmul.f32 %v435, %v519
  %v548 = vmul.f32 %v436, %v521
  %v549 = vmul.f32 %v437, %v523
  %v550 = vmul.f32 %v438, %v525
  %v551 = vmul.f32 %v439, %v527
  %v552 = vmul.f32 %v440, %v529
  %v553 = vmul.f32 %v441, %v531
  %v554 = vmul.f32 %v442, %v533
  %v555 = vmul.f32 %v443, %v535
  %v556 = vmul.f32 %v444, %v537
  %v557 = vmul.f32 %v445, %v539
  %v558 = vmul.f32 %v446, %v541
  %v559 = vmul.f32 %v447, %v543
  %560 = vst.msk [vmem:[%s5] sm:$0xff] %vm303, %v544
  %561 = vst.msk [vmem:[%s5 + $0x8] sm:$0xff] %vm303, %v545
  %562 = vst.msk [vmem:[%s5 + $0x10] sm:$0xff] %vm303, %v546
  %563 = vst.msk [vmem:[%s5 + $0x18] sm:$0xff] %vm303, %v547
  %564 = vst.msk [vmem:[%s5 + $0x20] sm:$0xff] %vm303, %v548
  %565 = vst.msk [vmem:[%s5 + $0x28] sm:$0xff] %vm303, %v549
  %566 = vst.msk [vmem:[%s5 + $0x30] sm:$0xff] %vm303, %v550
  %567 = vst.msk [vmem:[%s5 + $0x38] sm:$0xff] %vm303, %v551
  %568 = vst.msk [vmem:[%s5 + $0x40] sm:$0xff] %vm303, %v552
  %569 = vst.msk [vmem:[%s5 + $0x48] sm:$0xff] %vm303, %v553
  %570 = vst.msk [vmem:[%s5 + $0x50] sm:$0xff] %vm303, %v554
  %571 = vst.msk [vmem:[%s5 + $0x58] sm:$0xff] %vm303, %v555
  %572 = vst.msk [vmem:[%s5 + $0x60] sm:$0xff] %vm303, %v556
  %573 = vst.msk [vmem:[%s5 + $0x68] sm:$0xff] %vm303, %v557
  %574 = vst.msk [vmem:[%s5 + $0x70] sm:$0xff] %vm303, %v558
  %575 = vst.msk [vmem:[%s5 + $0x78] sm:$0xff] %vm303, %v559
  // Predicated region
  $region22: #{tpu_custom_call.1} parent=0 // pred_check
    _
  $region23: #{tpu_custom_call.1} parent=0 // pred_check_branch
    %577 = sbr.rel (0) target = $region25
  $region24: #{tpu_custom_call.1} parent=0 // pred_region
    _
  $region25: #{tpu_custom_call.1} parent=0 // pred_fallthru
    _
  // Predicated region
  $region26: #{tpu_custom_call.1} parent=0 // pred_check
    _
  $region27: #{tpu_custom_call.1} parent=0 // pred_check_branch
    %579 = sbr.rel (0) target = $region29
  $region28: #{tpu_custom_call.1} parent=0 // pred_region
    _
  $region29: #{tpu_custom_call.1} parent=0 // pred_fallthru
    _

</llo_original>
